<compile_context>
chip_gen: v7x
topology: tpu7x:2x2x1
jax: 0.10.0
libtpu: 0.0.40
codegen_flags: <defaults>
</compile_context>

<pallas_src>
import jax
import jax.numpy as jnp
from jax.experimental import pallas as pl
from jax.experimental.pallas import tpu as pltpu

BN_EPS = 1e-5
ROW_ALIGN = 16          # bf16 sublane-packed tile alignment for the batch axis


def _round_up(x, m):
    return (x + m - 1) // m * m


# --------------------------------------------------------------------------- #
# Kernel: one batch tile -> matmul+bias+ReLU, matmul+bias+ReLU, matmul+bias
# --------------------------------------------------------------------------- #
def rerank_mlp_kernel(x_ref, w1_ref, b1_ref, w2_ref, b2_ref, w3t_ref, b3_ref,
                      out_ref):
    # Linear(600 -> 256) + ReLU        (x, w1 bf16 operands; f32 accumulation)
    h1 = jnp.dot(x_ref[...], w1_ref[...],
                 preferred_element_type=jnp.float32) + b1_ref[...]
    h1 = jnp.maximum(h1, 0.0)                                     # f32 [TB, 256]

    # Linear(256 -> 128) + ReLU        (BN1 already folded into w2 / b2)
    h2 = jnp.dot(h1.astype(jnp.bfloat16), w2_ref[...],
                 preferred_element_type=jnp.float32) + b2_ref[...]
    h2 = jnp.maximum(h2, 0.0)                                     # f32 [TB, 128]

    # Linear(128 -> 1)                 (BN2 folded into w3 / b3)
    # Computed as (1,128) @ (128,TB): the per-row scalar lands lane-dense in a
    # (1, TB) strip, so HBM writeback is 4 B/row instead of a 512 B/row slab.
    out = jnp.dot(w3t_ref[...], h2.T.astype(jnp.bfloat16),
                  preferred_element_type=jnp.float32) + b3_ref[...]   # [1, TB]
    out_ref[...] = out.reshape(out_ref.shape)


# --------------------------------------------------------------------------- #
# Parameter prep: fold eval-mode BatchNorms into the following Linear layers,
# cast matmul operands to bf16 once.
# --------------------------------------------------------------------------- #
def fold_bn_params(p):
    s1 = p["g1"] * jax.lax.rsqrt(p["v1"] + BN_EPS)              # (1, 256)
    w2 = s1.T * p["w2"]                                          # (256, 128)
    b2 = (p["be1"] - p["m1"] * s1) @ p["w2"] + p["b2"]           # (1, 128)

    s2 = p["g2"] * jax.lax.rsqrt(p["v2"] + BN_EPS)              # (1, 128)
    w3 = s2.T * p["w3"]                                          # (128, 1)
    b3 = (p["be2"] - p["m2"] * s2) @ p["w3"] + p["b3"]           # (1, 1)

    return dict(
        w1=p["w1"].astype(jnp.bfloat16),
        b1=p["b1"].astype(jnp.float32),
        w2=w2.astype(jnp.bfloat16),
        b2=b2.astype(jnp.float32),
        w3t=w3.T.astype(jnp.bfloat16),      # (1, 128): lane-dense row vector
        b3=b3.astype(jnp.float32),          # (1, 1)
    )


# --------------------------------------------------------------------------- #
# Wrapper
# --------------------------------------------------------------------------- #
def rerank_forward(x, fp, *, block_rows=2048, vmem_limit_bytes=None):
    """x: [B, 600] (bf16 preferred). fp: folded params. Returns [B, 1] float32."""
    B, K = x.shape
    H1 = fp["w1"].shape[1]
    H2 = fp["w2"].shape[1]

    if x.dtype != jnp.bfloat16:
        # Prefer a bf16 x straight from the producer: a wrapper-side cast is an
        # extra full HBM pass over the activation stream.
        x = x.astype(jnp.bfloat16)

    # Batch tile: large enough to amortize the ~0.35 us per-grid-step overhead,
    # capped so there are >= 2 tiles whenever possible (v7x megacore sharding).
    # ~7 MiB VMEM at TB=2048 (bf16 x tile x2 buffers + f32 h1/h2 temporaries +
    # resident weights) fits every generation's default scoped-VMEM budget.
    block_rows = max(ROW_ALIGN, _round_up(block_rows, ROW_ALIGN))
    TB = min(block_rows, _round_up(pl.cdiv(B, 2), ROW_ALIGN))
    num_tiles = pl.cdiv(B, TB)   # no wrapper-side pad: Pallas handles the
                                 # ragged last tile (OOB rows sliced off below)

    const2d = lambda i: (0, 0)   # weights/biases stay VMEM-resident across steps

    out = pl.pallas_call(
        rerank_mlp_kernel,
        out_shape=jax.ShapeDtypeStruct((num_tiles, 1, TB), jnp.float32),
        grid=(num_tiles,),
        in_specs=[
            pl.BlockSpec((TB, K), lambda i: (i, 0)),   # x: streamed per batch tile
            pl.BlockSpec((K, H1), const2d),            # w1        (bf16)
            pl.BlockSpec((1, H1), const2d),            # b1        (f32)
            pl.BlockSpec((H1, H2), const2d),           # w2 folded (bf16)
            pl.BlockSpec((1, H2), const2d),            # b2 folded (f32)
            pl.BlockSpec((1, H2), const2d),            # w3.T fold (bf16)
            pl.BlockSpec((1, 1), const2d),             # b3 folded (f32)
        ],
        out_specs=pl.BlockSpec((1, 1, TB), lambda i: (i, 0, 0)),
        compiler_params=pltpu.CompilerParams(
            dimension_semantics=("parallel",),
            vmem_limit_bytes=vmem_limit_bytes,
        ),
    )(x, fp["w1"], fp["b1"], fp["w2"], fp["b2"], fp["w3t"], fp["b3"])

    # (num_tiles, 1, TB) -> (B, 1); the boundary tile's out-of-range lanes hold
    # unspecified values and are dropped here (never relied upon to be zero).
    return out.reshape(num_tiles * TB)[:B].reshape(B, 1)


# --------------------------------------------------------------------------- #
# Deterministic synthetic parameters + pure-JAX reference (PyTorch eval mode)
# --------------------------------------------------------------------------- #
def init_params(key, input_dim=600, h1=256, h2=128):
    ks = jax.random.split(key, 8)

    def lin(kw, kb, fan_in, fan_out):
        bound = 1.0 / jnp.sqrt(fan_in)
        w = jax.random.uniform(kw, (fan_in, fan_out), jnp.float32, -bound, bound)
        b = jax.random.uniform(kb, (1, fan_out), jnp.float32, -bound, bound)
        return w, b

    w1, b1 = lin(ks[0], ks[1], input_dim, h1)
    w2, b2 = lin(ks[2], ks[3], h1, h2)
    w3, b3 = lin(ks[4], ks[5], h2, 1)

    g1 = 1.0 + 0.1 * jax.random.normal(ks[6], (1, h1), jnp.float32)
    be1 = 0.05 * jnp.ones((1, h1), jnp.float32)
    m1 = 0.01 * jnp.arange(h1, dtype=jnp.float32).reshape(1, h1) / h1
    v1 = 1.0 + 0.02 * jnp.arange(h1, dtype=jnp.float32).reshape(1, h1) / h1

    g2 = 1.0 + 0.1 * jax.random.normal(ks[7], (1, h2), jnp.float32)
    be2 = -0.03 * jnp.ones((1, h2), jnp.float32)
    m2 = -0.02 * jnp.arange(h2, dtype=jnp.float32).reshape(1, h2) / h2
    v2 = 1.0 + 0.05 * jnp.arange(h2, dtype=jnp.float32).reshape(1, h2) / h2

    return dict(w1=w1, b1=b1, g1=g1, be1=be1, m1=m1, v1=v1,
                w2=w2, b2=b2, g2=g2, be2=be2, m2=m2, v2=v2,
                w3=w3, b3=b3)


def reference_forward(x, p):
    """Pure-JAX f32 reference mirroring the PyTorch eval-mode forward (unfolded)."""
    h = jnp.maximum(x @ p["w1"] + p["b1"], 0.0)
    h = (h - p["m1"]) * jax.lax.rsqrt(p["v1"] + BN_EPS) * p["g1"] + p["be1"]
    h = jnp.maximum(h @ p["w2"] + p["b2"], 0.0)
    h = (h - p["m2"]) * jax.lax.rsqrt(p["v2"] + BN_EPS) * p["g2"] + p["be2"]
    return h @ p["w3"] + p["b3"]


if __name__ == "__main__":
    key = jax.random.PRNGKey(0)
    k_x, k_p = jax.random.split(key)

    B, D_IN = 8, 600                      # module default input_dim=600, small batch
    x_f32 = jax.random.normal(k_x, (B, D_IN), jnp.float32)
    params = init_params(k_p, input_dim=D_IN)
    folded = fold_bn_params(params)

    # Cast at the "producer" so the kernel's HBM stream of x is already bf16.
    x_bf16 = x_f32.astype(jnp.bfloat16)

    out = rerank_forward(x_bf16, folded)
    out = jax.block_until_ready(out)

    ref = reference_forward(x_f32, params)
    assert out.shape == (B, 1)
    assert jnp.allclose(out, ref, atol=2e-2, rtol=2e-2), "mismatch vs JAX reference"

    print("KERNEL_OK")
</pallas_src>

<mosaic_0001>
module attributes {stable_mosaic.version = 11 : i64} {
  func.func @rerank_mlp_kernel(%arg0: i32, %arg1: memref<16x600xbf16, #tpu.memory_space<vmem>>, %arg2: memref<600x256xbf16, #tpu.memory_space<vmem>>, %arg3: memref<1x256xf32, #tpu.memory_space<vmem>>, %arg4: memref<256x128xbf16, #tpu.memory_space<vmem>>, %arg5: memref<1x128xf32, #tpu.memory_space<vmem>>, %arg6: memref<1x128xbf16, #tpu.memory_space<vmem>>, %arg7: memref<1x1xf32, #tpu.memory_space<vmem>>, %arg8: memref<1x1x16xf32, #tpu.memory_space<vmem>>) attributes {dimension_semantics = [#tpu.dimension_semantics<parallel>], iteration_bounds = array<i64: 1>, scalar_prefetch = 0 : i64, scratch_operands = 0 : i64, tpu.core_type = #tpu.core_type<tc>, window_params = [{transform_indices = @transform_0, window_bounds = array<i64: 16, 600>}, {pipeline_mode = #tpu.pipeline_mode<synchronous>, transform_indices = @transform_1, window_bounds = array<i64: 600, 256>}, {pipeline_mode = #tpu.pipeline_mode<synchronous>, transform_indices = @transform_2, window_bounds = array<i64: 1, 256>}, {pipeline_mode = #tpu.pipeline_mode<synchronous>, transform_indices = @transform_3, window_bounds = array<i64: 256, 128>}, {pipeline_mode = #tpu.pipeline_mode<synchronous>, transform_indices = @transform_4, window_bounds = array<i64: 1, 128>}, {pipeline_mode = #tpu.pipeline_mode<synchronous>, transform_indices = @transform_5, window_bounds = array<i64: 1, 128>}, {pipeline_mode = #tpu.pipeline_mode<synchronous>, transform_indices = @transform_6, window_bounds = array<i64: 1, 1>}, {transform_indices = @transform_7, window_bounds = array<i64: 1, 1, 16>}]} {
    %c0 = arith.constant 0 : index
    %c0_0 = arith.constant 0 : index
    %0 = vector.load %arg1[%c0, %c0_0] : memref<16x600xbf16, #tpu.memory_space<vmem>>, vector<16x600xbf16>
    %c0_1 = arith.constant 0 : index
    %c0_2 = arith.constant 0 : index
    %1 = vector.load %arg2[%c0_1, %c0_2] : memref<600x256xbf16, #tpu.memory_space<vmem>>, vector<600x256xbf16>
    %cst = arith.constant dense<0.000000e+00> : vector<16x256xf32>
    %2 = tpu.matmul %0, %1, %cst {dimension_numbers = #tpu.dot_dimension_numbers<[1], [0], [0], [1], [0, 0, 1, 1], [], []>} : vector<16x600xbf16>, vector<600x256xbf16>, vector<16x256xf32> -> vector<16x256xf32>
    %c0_3 = arith.constant 0 : index
    %c0_4 = arith.constant 0 : index
    %3 = vector.load %arg3[%c0_3, %c0_4] : memref<1x256xf32, #tpu.memory_space<vmem>>, vector<1x256xf32>
    %4 = vector.broadcast %3 : vector<1x256xf32> to vector<16x256xf32>
    %5 = arith.addf %2, %4 : vector<16x256xf32>
    %cst_5 = arith.constant 0.000000e+00 : f32
    %6 = vector.broadcast %cst_5 : f32 to vector<16x256xf32>
    %7 = arith.maximumf %5, %6 : vector<16x256xf32>
    %8 = arith.truncf %7 : vector<16x256xf32> to vector<16x256xbf16>
    %c0_6 = arith.constant 0 : index
    %c0_7 = arith.constant 0 : index
    %9 = vector.load %arg4[%c0_6, %c0_7] : memref<256x128xbf16, #tpu.memory_space<vmem>>, vector<256x128xbf16>
    %cst_8 = arith.constant dense<0.000000e+00> : vector<16x128xf32>
    %10 = tpu.matmul %8, %9, %cst_8 {dimension_numbers = #tpu.dot_dimension_numbers<[1], [0], [0], [1], [0, 0, 1, 1], [], []>} : vector<16x256xbf16>, vector<256x128xbf16>, vector<16x128xf32> -> vector<16x128xf32>
    %c0_9 = arith.constant 0 : index
    %c0_10 = arith.constant 0 : index
    %11 = vector.load %arg5[%c0_9, %c0_10] : memref<1x128xf32, #tpu.memory_space<vmem>>, vector<1x128xf32>
    %12 = vector.broadcast %11 : vector<1x128xf32> to vector<16x128xf32>
    %13 = arith.addf %10, %12 : vector<16x128xf32>
    %cst_11 = arith.constant 0.000000e+00 : f32
    %14 = vector.broadcast %cst_11 : f32 to vector<16x128xf32>
    %15 = arith.maximumf %13, %14 : vector<16x128xf32>
    %c0_12 = arith.constant 0 : index
    %c0_13 = arith.constant 0 : index
    %16 = vector.load %arg6[%c0_12, %c0_13] : memref<1x128xbf16, #tpu.memory_space<vmem>>, vector<1x128xbf16>
    %17 = tpu.transpose %15, [1, 0] : vector<16x128xf32> -> vector<128x16xf32>
    %18 = arith.truncf %17 : vector<128x16xf32> to vector<128x16xbf16>
    %cst_14 = arith.constant dense<0.000000e+00> : vector<1x16xf32>
    %19 = tpu.matmul %16, %18, %cst_14 {dimension_numbers = #tpu.dot_dimension_numbers<[1], [0], [0], [1], [0, 0, 1, 1], [], []>} : vector<1x128xbf16>, vector<128x16xbf16>, vector<1x16xf32> -> vector<1x16xf32>
    %c0_15 = arith.constant 0 : index
    %c0_16 = arith.constant 0 : index
    %20 = vector.load %arg7[%c0_15, %c0_16] : memref<1x1xf32, #tpu.memory_space<vmem>>, vector<1x1xf32>
    %21 = vector.broadcast %20 : vector<1x1xf32> to vector<1x16xf32>
    %22 = arith.addf %19, %21 : vector<1x16xf32>
    %23 = vector.shape_cast %22 : vector<1x16xf32> to vector<1x1x16xf32>
    %c0_17 = arith.constant 0 : index
    %c0_18 = arith.constant 0 : index
    %c0_19 = arith.constant 0 : index
    %24 = vector.load %arg8[%c0_17, %c0_18, %c0_19] : memref<1x1x16xf32, #tpu.memory_space<vmem>>, vector<1x1x16xf32>
    tpu.vector_store %arg8[%c0_17, %c0_18, %c0_19], %23 {strides = array<i32>} : memref<1x1x16xf32, #tpu.memory_space<vmem>>, vector<1x1x16xf32>,
    return
  }
  func.func @transform_0(%arg0: i32) -> (i32, i32) {
    %c0_i32 = arith.constant 0 : i32
    %c0_i32_0 = arith.constant 0 : i32
    return %arg0, %c0_i32 : i32, i32
  }
  func.func @transform_1(%arg0: i32) -> (i32, i32) {
    %c0_i32 = arith.constant 0 : i32
    %c0_i32_0 = arith.constant 0 : i32
    %c0_i32_1 = arith.constant 0 : i32
    return %c0_i32, %c0_i32_0 : i32, i32
  }
  func.func @transform_2(%arg0: i32) -> (i32, i32) {
    %c0_i32 = arith.constant 0 : i32
    %c0_i32_0 = arith.constant 0 : i32
    %c0_i32_1 = arith.constant 0 : i32
    return %c0_i32, %c0_i32_0 : i32, i32
  }
  func.func @transform_3(%arg0: i32) -> (i32, i32) {
    %c0_i32 = arith.constant 0 : i32
    %c0_i32_0 = arith.constant 0 : i32
    %c0_i32_1 = arith.constant 0 : i32
    return %c0_i32, %c0_i32_0 : i32, i32
  }
  func.func @transform_4(%arg0: i32) -> (i32, i32) {
    %c0_i32 = arith.constant 0 : i32
    %c0_i32_0 = arith.constant 0 : i32
    %c0_i32_1 = arith.constant 0 : i32
    return %c0_i32, %c0_i32_0 : i32, i32
  }
  func.func @transform_5(%arg0: i32) -> (i32, i32) {
    %c0_i32 = arith.constant 0 : i32
    %c0_i32_0 = arith.constant 0 : i32
    %c0_i32_1 = arith.constant 0 : i32
    return %c0_i32, %c0_i32_0 : i32, i32
  }
  func.func @transform_6(%arg0: i32) -> (i32, i32) {
    %c0_i32 = arith.constant 0 : i32
    %c0_i32_0 = arith.constant 0 : i32
    %c0_i32_1 = arith.constant 0 : i32
    return %c0_i32, %c0_i32_0 : i32, i32
  }
  func.func @transform_7(%arg0: i32) -> (i32, i32, i32) {
    %c0_i32 = arith.constant 0 : i32
    %c0_i32_0 = arith.constant 0 : i32
    %c0_i32_1 = arith.constant 0 : i32
    return %arg0, %c0_i32, %c0_i32_0 : i32, i32, i32
  }
}

</mosaic_0001>

<llo_original>
// kernel: tpu_custom_call.1
$region0: #{tpu_custom_call.1}
  #allocation0 [shape = 'u32[]', space=smem, size = 0x4, offset = 0x4, fixed_abs, tag = 'smem constant byte address 0x4 - core index']
  #allocation1 [shape = 'u32[144,128]{1,0:T(1,128)}', space=vmem, size = 0x12000, scoped, tag = 'internal scratch']
  #allocation2 [shape = 'f32[1,1]{1,0:T(1,128)S(1)}', space=vmem, size = 0x200, scoped, tag = 'scoped memory for tpu_custom_call.1']
  %s0 = inlined_call_operand.hbm [shape: bf16[8,600], index: 0, kind: input, shape index: {}]
  %s1 = inlined_call_operand.hbm [shape: bf16[600,256], index: 1, kind: input, shape index: {}]
  %s2 = inlined_call_operand.vmem [shape: f32[1,256], index: 2, kind: input, shape index: {}]
  %s3 = inlined_call_operand.hbm [shape: bf16[256,128], index: 3, kind: input, shape index: {}]
  %s4 = inlined_call_operand.vmem [shape: f32[1,128], index: 4, kind: input, shape index: {}]
  %s5 = inlined_call_operand.vmem [shape: bf16[1,128], index: 5, kind: input, shape index: {}]
  %s6 = inlined_call_operand.<no memory space> [shape: f32[1,1], index: 6, kind: input, shape index: {}]
  %s7 = inlined_call_operand.hbm [shape: f32[1,1,16], index: 7, kind: output, shape index: {}]
  %s8 = sld [smem:[#allocation0]]
  $region50: #{tpu_custom_call.1} parent=0
    _
  %s10 = ssub.s32 1, %s8
  %s11 = scalar_select 0, %s10, %s8
  %v12 = vstv %s6
  %13 = vst [vmem:[#allocation2] sm:$0x1] %v12
  $region1: #{tpu_custom_call.1} parent=0
    #allocation3 [shape = 'u8[20480]{0}', space=vmem, size = 0x5000, scoped, tag = 'input window, operand 0, single buffered']
    #allocation4 [shape = 's32[1]{0}', space=sflag, size = 0x4, scoped, tag = 'scoped memory for tpu_custom_call.1']
    #allocation5 [shape = 's32[1]{0}', space=sflag, size = 0x4, scoped, tag = 'scoped memory for tpu_custom_call.1']
    #allocation6 [shape = 'u8[307200]{0}', space=vmem, size = 0x4b000, scoped, tag = 'input window, operand 1, single buffered']
    #allocation7 [shape = 's32[1]{0}', space=sflag, size = 0x4, scoped, tag = 'scoped memory for tpu_custom_call.1']
    #allocation8 [shape = 'u8[65536]{0}', space=vmem, size = 0x10000, scoped, tag = 'input window, operand 3, single buffered']
    #allocation9 [shape = 'u8[512]{0}', space=vmem, size = 0x400, scoped, tag = 'output window, operand 0, single buffered']
    %14 = vsyncpa [#allocation4], 0
    %15 = vsyncpa [#allocation7], 0
    %16 = vsyncpa [#allocation5], 0
    // Predicated region
    $region2: #{tpu_custom_call.1} parent=1 // pred_check
      _
    $region3: #{tpu_custom_call.1} parent=1 // pred_check_branch
      %18 = sbr.rel (0) target = $region5
    $region4: #{tpu_custom_call.1} parent=1 // pred_region
      %s20 = ssub.s32 640, 320
      %21 = vsyncadd [#allocation4], %s20
      %s22 = sshll.u32 [#allocation3], 4
      %s23 = int_to_ptr.vmem [resolvable:$true] %s22
      %28 = dma.hbm_to_vmem [thread:$0]  %s0, 320, %s23, [#allocation4], 320, 320, 20
    $region5: #{tpu_custom_call.1} parent=1 // pred_fallthru
      _
    // Predicated region
    $region6: #{tpu_custom_call.1} parent=1 // pred_check
      _
    $region7: #{tpu_custom_call.1} parent=1 // pred_check_branch
      %30 = sbr.rel (0) target = $region9
    $region8: #{tpu_custom_call.1} parent=1 // pred_region
      %s32 = ssub.s32 9600, 9600
      %33 = vsyncadd [#allocation7], %s32
      %s34 = sshll.u32 [#allocation6], 4
      %s35 = int_to_ptr.vmem [resolvable:$true] %s34
      %40 = dma.hbm_to_vmem [thread:$0]  %s1, 9600, %s35, [#allocation7], 128, 128, 8
    $region9: #{tpu_custom_call.1} parent=1 // pred_fallthru
      _
    // Predicated region
    $region10: #{tpu_custom_call.1} parent=1 // pred_check
      _
    $region11: #{tpu_custom_call.1} parent=1 // pred_check_branch
      %42 = sbr.rel (0) target = $region13
    $region12: #{tpu_custom_call.1} parent=1 // pred_region
      _
    $region13: #{tpu_custom_call.1} parent=1 // pred_fallthru
      _
    // Predicated region
    $region14: #{tpu_custom_call.1} parent=1 // pred_check
      _
    $region15: #{tpu_custom_call.1} parent=1 // pred_check_branch
      %44 = sbr.rel (0) target = $region17
    $region16: #{tpu_custom_call.1} parent=1 // pred_region
      %s46 = ssub.s32 2048, 2048
      %47 = vsyncadd [#allocation7], %s46
      %s48 = sshll.u32 [#allocation8], 4
      %s49 = int_to_ptr.vmem [resolvable:$true] %s48
      %54 = dma.hbm_to_vmem [thread:$0]  %s3, 2048, %s49, [#allocation7], 64, 64, 4
    $region17: #{tpu_custom_call.1} parent=1 // pred_fallthru
      _
    // Predicated region
    $region18: #{tpu_custom_call.1} parent=1 // pred_check
      _
    $region19: #{tpu_custom_call.1} parent=1 // pred_check_branch
      %56 = sbr.rel (0) target = $region21
    $region20: #{tpu_custom_call.1} parent=1 // pred_region
      _
    $region21: #{tpu_custom_call.1} parent=1 // pred_fallthru
      _
    // Predicated region
    $region22: #{tpu_custom_call.1} parent=1 // pred_check
      _
    $region23: #{tpu_custom_call.1} parent=1 // pred_check_branch
      %58 = sbr.rel (0) target = $region25
    $region24: #{tpu_custom_call.1} parent=1 // pred_region
      _
    $region25: #{tpu_custom_call.1} parent=1 // pred_fallthru
      _
    // Predicated region
    $region26: #{tpu_custom_call.1} parent=1 // pred_check
      _
    $region27: #{tpu_custom_call.1} parent=1 // pred_check_branch
      %60 = sbr.rel (0) target = $region29
    $region28: #{tpu_custom_call.1} parent=1 // pred_region
      _
    $region29: #{tpu_custom_call.1} parent=1 // pred_fallthru
      _
    // Predicated region
    $region30: #{tpu_custom_call.1} parent=1 // pred_check
      _
    $region31: #{tpu_custom_call.1} parent=1 // pred_check_branch
      %62 = sbr.rel (0) target = $region33
    $region32: #{tpu_custom_call.1} parent=1 // pred_region
      %63 = dma.done [#allocation4], 640
    $region33: #{tpu_custom_call.1} parent=1 // pred_fallthru
      _
    // Predicated region
    $region34: #{tpu_custom_call.1} parent=1 // pred_check
      _
    $region35: #{tpu_custom_call.1} parent=1 // pred_check_branch
      %65 = sbr.rel (0) target = $region37
    $region36: #{tpu_custom_call.1} parent=1 // pred_region
      %66 = dma.done [#allocation7], 9600
    $region37: #{tpu_custom_call.1} parent=1 // pred_fallthru
      _
    // Predicated region
    $region38: #{tpu_custom_call.1} parent=1 // pred_check
      _
    $region39: #{tpu_custom_call.1} parent=1 // pred_check_branch
      %68 = sbr.rel (0) target = $region41
    $region40: #{tpu_custom_call.1} parent=1 // pred_region
      %69 = dma.done [#allocation7], 2048
    $region41: #{tpu_custom_call.1} parent=1 // pred_fallthru
      _
    %v71 = vld [vmem:[#allocation3] sm:$0xff]
    %v72 = vld [vmem:[#allocation3 + $0x8] sm:$0xff]
    %v73 = vld [vmem:[#allocation3 + $0x10] sm:$0xf]
    %v74 = vld [vmem:[#allocation3 + $0x14] sm:$0xff]
    %v75 = vld [vmem:[#allocation3 + $0x1c] sm:$0xff]
    %v76 = vld [vmem:[#allocation3 + $0x24] sm:$0xf]
    %v77 = vld [vmem:[#allocation6] sm:$0xff]
    %v78 = vld [vmem:[#allocation6 + $0x8] sm:$0xff]
    %v79 = vld [vmem:[#allocation6 + $0x10] sm:$0xff]
    %v80 = vld [vmem:[#allocation6 + $0x18] sm:$0xff]
    %v81 = vld [vmem:[#allocation6 + $0x20] sm:$0xff]
    %v82 = vld [vmem:[#allocation6 + $0x28] sm:$0xff]
    %v83 = vld [vmem:[#allocation6 + $0x30] sm:$0xff]
    %v84 = vld [vmem:[#allocation6 + $0x38] sm:$0xff]
    %v85 = vld [vmem:[#allocation6 + $0x40] sm:$0xff]
    %v86 = vld [vmem:[#allocation6 + $0x48] sm:$0xff]
    %v87 = vld [vmem:[#allocation6 + $0x50] sm:$0xff]
    %v88 = vld [vmem:[#allocation6 + $0x58] sm:$0xff]
    %v89 = vld [vmem:[#allocation6 + $0x60] sm:$0xff]
    %v90 = vld [vmem:[#allocation6 + $0x68] sm:$0xff]
    %v91 = vld [vmem:[#allocation6 + $0x70] sm:$0xff]
    %v92 = vld [vmem:[#allocation6 + $0x78] sm:$0xff]
    %v93 = vld [vmem:[#allocation6 + $0x80] sm:$0xff]
    %v94 = vld [vmem:[#allocation6 + $0x88] sm:$0xff]
    %v95 = vld [vmem:[#allocation6 + $0x90] sm:$0xff]
    %v96 = vld [vmem:[#allocation6 + $0x98] sm:$0xff]
    %v97 = vld [vmem:[#allocation6 + $0xa0] sm:$0xff]
    %v98 = vld [vmem:[#allocation6 + $0xa8] sm:$0xff]
    %v99 = vld [vmem:[#allocation6 + $0xb0] sm:$0xff]
    %v100 = vld [vmem:[#allocation6 + $0xb8] sm:$0xff]
    %v101 = vld [vmem:[#allocation6 + $0xc0] sm:$0xff]
    %v102 = vld [vmem:[#allocation6 + $0xc8] sm:$0xff]
    %v103 = vld [vmem:[#allocation6 + $0xd0] sm:$0xff]
    %v104 = vld [vmem:[#allocation6 + $0xd8] sm:$0xff]
    %v105 = vld [vmem:[#allocation6 + $0xe0] sm:$0xff]
    %v106 = vld [vmem:[#allocation6 + $0xe8] sm:$0xff]
    %v107 = vld [vmem:[#allocation6 + $0xf0] sm:$0xff]
    %v108 = vld [vmem:[#allocation6 + $0xf8] sm:$0xff]
    %v109 = vld [vmem:[#allocation6 + $0x100] sm:$0xff]
    %v110 = vld [vmem:[#allocation6 + $0x108] sm:$0xff]
    %v111 = vld [vmem:[#allocation6 + $0x110] sm:$0xff]
    %v112 = vld [vmem:[#allocation6 + $0x118] sm:$0xff]
    %v113 = vld [vmem:[#allocation6 + $0x120] sm:$0xff]
    %v114 = vld [vmem:[#allocation6 + $0x128] sm:$0xff]
    %v115 = vld [vmem:[#allocation6 + $0x130] sm:$0xff]
    %v116 = vld [vmem:[#allocation6 + $0x138] sm:$0xff]
    %v117 = vld [vmem:[#allocation6 + $0x140] sm:$0xff]
    %v118 = vld [vmem:[#allocation6 + $0x148] sm:$0xff]
    %v119 = vld [vmem:[#allocation6 + $0x150] sm:$0xff]
    %v120 = vld [vmem:[#allocation6 + $0x158] sm:$0xff]
    %v121 = vld [vmem:[#allocation6 + $0x160] sm:$0xff]
    %v122 = vld [vmem:[#allocation6 + $0x168] sm:$0xff]
    %v123 = vld [vmem:[#allocation6 + $0x170] sm:$0xff]
    %v124 = vld [vmem:[#allocation6 + $0x178] sm:$0xff]
    %v125 = vld [vmem:[#allocation6 + $0x180] sm:$0xff]
    %v126 = vld [vmem:[#allocation6 + $0x188] sm:$0xff]
    %v127 = vld [vmem:[#allocation6 + $0x190] sm:$0xff]
    %v128 = vld [vmem:[#allocation6 + $0x198] sm:$0xff]
    %v129 = vld [vmem:[#allocation6 + $0x1a0] sm:$0xff]
    %v130 = vld [vmem:[#allocation6 + $0x1a8] sm:$0xff]
    %v131 = vld [vmem:[#allocation6 + $0x1b0] sm:$0xff]
    %v132 = vld [vmem:[#allocation6 + $0x1b8] sm:$0xff]
    %v133 = vld [vmem:[#allocation6 + $0x1c0] sm:$0xff]
    %v134 = vld [vmem:[#allocation6 + $0x1c8] sm:$0xff]
    %v135 = vld [vmem:[#allocation6 + $0x1d0] sm:$0xff]
    %v136 = vld [vmem:[#allocation6 + $0x1d8] sm:$0xff]
    %v137 = vld [vmem:[#allocation6 + $0x1e0] sm:$0xff]
    %v138 = vld [vmem:[#allocation6 + $0x1e8] sm:$0xff]
    %v139 = vld [vmem:[#allocation6 + $0x1f0] sm:$0xff]
    %v140 = vld [vmem:[#allocation6 + $0x1f8] sm:$0xff]
    %v141 = vld [vmem:[#allocation6 + $0x200] sm:$0xff]
    %v142 = vld [vmem:[#allocation6 + $0x208] sm:$0xff]
    %v143 = vld [vmem:[#allocation6 + $0x210] sm:$0xff]
    %v144 = vld [vmem:[#allocation6 + $0x218] sm:$0xff]
    %v145 = vld [vmem:[#allocation6 + $0x220] sm:$0xff]
    %v146 = vld [vmem:[#allocation6 + $0x228] sm:$0xff]
    %v147 = vld [vmem:[#allocation6 + $0x230] sm:$0xff]
    %v148 = vld [vmem:[#allocation6 + $0x238] sm:$0xff]
    %v149 = vld [vmem:[#allocation6 + $0x240] sm:$0xff]
    %v150 = vld [vmem:[#allocation6 + $0x248] sm:$0xff]
    %v151 = vld [vmem:[#allocation6 + $0x250] sm:$0xff]
    %v152 = vld [vmem:[%s2] sm:$0x3]
    %v154 = vlaneseq
    %v155 = vshrl.u32 %v154, 7
    %v156 = vsub.s32 0, %v155
    %v157 = vrot.slane %v152, %v156
    %v158 = vlaneseq
    %v159 = vshrl.u32 %v158, 7
    %v160 = vsub.s32 1, %v159
    %v161 = vrot.slane %v152, %v160
    %v170 = vunpack.c.l.b16 %v71
    %v171 = vunpack.c.h.b16 %v71
    %v172 = vunpack.c.l.b16 %v72
    %v173 = vunpack.c.h.b16 %v72
    %v174 = vunpack.c.l.b16 %v73
    %v175 = vunpack.c.l.b16 %v74
    %v176 = vunpack.c.h.b16 %v74
    %v177 = vunpack.c.l.b16 %v75
    %v178 = vunpack.c.h.b16 %v75
    %v179 = vunpack.c.l.b16 %v76
    %v180 = vpack.c.b16 %v175, %v170
    %v181 = vpack.c.b16 %v176, %v171
    %v182 = vpack.c.b16 %v177, %v172
    %v183 = vpack.c.b16 %v178, %v173
    %v184 = vpack.c.b16 %v179, %v174
    %v264 = vunpack.c.l.b16 %v77
    %v265 = vunpack.c.h.b16 %v77
    %v266 = vunpack.c.l.b16 %v78
    %v267 = vunpack.c.h.b16 %v78
    %v268 = vunpack.c.l.b16 %v79
    %v269 = vunpack.c.h.b16 %v79
    %v270 = vunpack.c.l.b16 %v80
    %v271 = vunpack.c.h.b16 %v80
    %v272 = vunpack.c.l.b16 %v81
    %v273 = vunpack.c.h.b16 %v81
    %v274 = vunpack.c.l.b16 %v82
    %v275 = vunpack.c.h.b16 %v82
    %v276 = vunpack.c.l.b16 %v83
    %v277 = vunpack.c.h.b16 %v83
    %v278 = vunpack.c.l.b16 %v84
    %v279 = vunpack.c.h.b16 %v84
    %v280 = vunpack.c.l.b16 %v85
    %v281 = vunpack.c.h.b16 %v85
    %v282 = vunpack.c.l.b16 %v86
    %v283 = vunpack.c.h.b16 %v86
    %v284 = vunpack.c.l.b16 %v87
    %v285 = vunpack.c.h.b16 %v87
    %v286 = vunpack.c.l.b16 %v88
    %v287 = vunpack.c.h.b16 %v88
    %v288 = vunpack.c.l.b16 %v89
    %v289 = vunpack.c.h.b16 %v89
    %v290 = vunpack.c.l.b16 %v90
    %v291 = vunpack.c.h.b16 %v90
    %v292 = vunpack.c.l.b16 %v91
    %v293 = vunpack.c.h.b16 %v91
    %v294 = vunpack.c.l.b16 %v92
    %v295 = vunpack.c.h.b16 %v92
    %v296 = vunpack.c.l.b16 %v93
    %v297 = vunpack.c.h.b16 %v93
    %v298 = vunpack.c.l.b16 %v94
    %v299 = vunpack.c.h.b16 %v94
    %v300 = vunpack.c.l.b16 %v95
    %v301 = vunpack.c.h.b16 %v95
    %v302 = vunpack.c.l.b16 %v96
    %v303 = vunpack.c.h.b16 %v96
    %v304 = vunpack.c.l.b16 %v97
    %v305 = vunpack.c.h.b16 %v97
    %v306 = vunpack.c.l.b16 %v98
    %v307 = vunpack.c.h.b16 %v98
    %v308 = vunpack.c.l.b16 %v99
    %v309 = vunpack.c.h.b16 %v99
    %v310 = vunpack.c.l.b16 %v100
    %v311 = vunpack.c.h.b16 %v100
    %v312 = vunpack.c.l.b16 %v101
    %v313 = vunpack.c.h.b16 %v101
    %v314 = vunpack.c.l.b16 %v102
    %v315 = vunpack.c.h.b16 %v102
    %v316 = vunpack.c.l.b16 %v103
    %v317 = vunpack.c.h.b16 %v103
    %v318 = vunpack.c.l.b16 %v104
    %v319 = vunpack.c.h.b16 %v104
    %v320 = vunpack.c.l.b16 %v105
    %v321 = vunpack.c.h.b16 %v105
    %v322 = vunpack.c.l.b16 %v106
    %v323 = vunpack.c.h.b16 %v106
    %v324 = vunpack.c.l.b16 %v107
    %v325 = vunpack.c.h.b16 %v107
    %v326 = vunpack.c.l.b16 %v108
    %v327 = vunpack.c.h.b16 %v108
    %v328 = vunpack.c.l.b16 %v109
    %v329 = vunpack.c.h.b16 %v109
    %v330 = vunpack.c.l.b16 %v110
    %v331 = vunpack.c.h.b16 %v110
    %v332 = vunpack.c.l.b16 %v111
    %v333 = vunpack.c.h.b16 %v111
    %v334 = vunpack.c.l.b16 %v112
    %v335 = vunpack.c.h.b16 %v112
    %v336 = vunpack.c.l.b16 %v113
    %v337 = vunpack.c.h.b16 %v113
    %v338 = vunpack.c.l.b16 %v114
    %v339 = vunpack.c.h.b16 %v114
    %v340 = vunpack.c.l.b16 %v115
    %v341 = vunpack.c.h.b16 %v115
    %v342 = vunpack.c.l.b16 %v116
    %v343 = vunpack.c.h.b16 %v116
    %v344 = vunpack.c.l.b16 %v117
    %v345 = vunpack.c.h.b16 %v117
    %v346 = vunpack.c.l.b16 %v118
    %v347 = vunpack.c.h.b16 %v118
    %v348 = vunpack.c.l.b16 %v119
    %v349 = vunpack.c.h.b16 %v119
    %v350 = vunpack.c.l.b16 %v120
    %v351 = vunpack.c.h.b16 %v120
    %v352 = vunpack.c.l.b16 %v121
    %v353 = vunpack.c.h.b16 %v121
    %v354 = vunpack.c.l.b16 %v122
    %v355 = vunpack.c.h.b16 %v122
    %v356 = vunpack.c.l.b16 %v123
    %v357 = vunpack.c.h.b16 %v123
    %v358 = vunpack.c.l.b16 %v124
    %v359 = vunpack.c.h.b16 %v124
    %v360 = vunpack.c.l.b16 %v125
    %v361 = vunpack.c.h.b16 %v125
    %v362 = vunpack.c.l.b16 %v126
    %v363 = vunpack.c.h.b16 %v126
    %v364 = vunpack.c.l.b16 %v127
    %v365 = vunpack.c.h.b16 %v127
    %v366 = vunpack.c.l.b16 %v128
    %v367 = vunpack.c.h.b16 %v128
    %v368 = vunpack.c.l.b16 %v129
    %v369 = vunpack.c.h.b16 %v129
    %v370 = vunpack.c.l.b16 %v130
    %v371 = vunpack.c.h.b16 %v130
    %v372 = vunpack.c.l.b16 %v131
    %v373 = vunpack.c.h.b16 %v131
    %v374 = vunpack.c.l.b16 %v132
    %v375 = vunpack.c.h.b16 %v132
    %v376 = vunpack.c.l.b16 %v133
    %v377 = vunpack.c.h.b16 %v133
    %v378 = vunpack.c.l.b16 %v134
    %v379 = vunpack.c.h.b16 %v134
    %v380 = vunpack.c.l.b16 %v135
    %v381 = vunpack.c.h.b16 %v135
    %v382 = vunpack.c.l.b16 %v136
    %v383 = vunpack.c.h.b16 %v136
    %v384 = vunpack.c.l.b16 %v137
    %v385 = vunpack.c.h.b16 %v137
    %v386 = vunpack.c.l.b16 %v138
    %v387 = vunpack.c.h.b16 %v138
    %v388 = vunpack.c.l.b16 %v139
    %v389 = vunpack.c.h.b16 %v139
    %v390 = vunpack.c.l.b16 %v140
    %v391 = vunpack.c.h.b16 %v140
    %v392 = vunpack.c.l.b16 %v141
    %v393 = vunpack.c.h.b16 %v141
    %v394 = vunpack.c.l.b16 %v142
    %v395 = vunpack.c.h.b16 %v142
    %v396 = vunpack.c.l.b16 %v143
    %v397 = vunpack.c.h.b16 %v143
    %v398 = vunpack.c.l.b16 %v144
    %v399 = vunpack.c.h.b16 %v144
    %v400 = vunpack.c.l.b16 %v145
    %v401 = vunpack.c.h.b16 %v145
    %v402 = vunpack.c.l.b16 %v146
    %v403 = vunpack.c.h.b16 %v146
    %v404 = vunpack.c.l.b16 %v147
    %v405 = vunpack.c.h.b16 %v147
    %v406 = vunpack.c.l.b16 %v148
    %v407 = vunpack.c.h.b16 %v148
    %v408 = vunpack.c.l.b16 %v149
    %v409 = vunpack.c.h.b16 %v149
    %v410 = vunpack.c.l.b16 %v150
    %v411 = vunpack.c.h.b16 %v150
    %v412 = vunpack.c.l.b16 %v151
    %v413 = vunpack.c.h.b16 %v151
    %v414 = vpack.c.b16 %v266, %v264
    %v415 = vpack.c.b16 %v267, %v265
    %v416 = vpack.c.b16 %v270, %v268
    %v417 = vpack.c.b16 %v271, %v269
    %v418 = vpack.c.b16 %v274, %v272
    %v419 = vpack.c.b16 %v275, %v273
    %v420 = vpack.c.b16 %v278, %v276
    %v421 = vpack.c.b16 %v279, %v277
    %v422 = vpack.c.b16 %v282, %v280
    %v423 = vpack.c.b16 %v283, %v281
    %v424 = vpack.c.b16 %v286, %v284
    %v425 = vpack.c.b16 %v287, %v285
    %v426 = vpack.c.b16 %v290, %v288
    %v427 = vpack.c.b16 %v291, %v289
    %v428 = vpack.c.b16 %v294, %v292
    %v429 = vpack.c.b16 %v295, %v293
    %v430 = vpack.c.b16 %v298, %v296
    %v431 = vpack.c.b16 %v299, %v297
    %v432 = vpack.c.b16 %v302, %v300
    %v433 = vpack.c.b16 %v303, %v301
    %v434 = vpack.c.b16 %v306, %v304
    %v435 = vpack.c.b16 %v307, %v305
    %v436 = vpack.c.b16 %v310, %v308
    %v437 = vpack.c.b16 %v311, %v309
    %v438 = vpack.c.b16 %v314, %v312
    %v439 = vpack.c.b16 %v315, %v313
    %v440 = vpack.c.b16 %v318, %v316
    %v441 = vpack.c.b16 %v319, %v317
    %v442 = vpack.c.b16 %v322, %v320
    %v443 = vpack.c.b16 %v323, %v321
    %v444 = vpack.c.b16 %v326, %v324
    %v445 = vpack.c.b16 %v327, %v325
    %v446 = vpack.c.b16 %v330, %v328
    %v447 = vpack.c.b16 %v331, %v329
    %v448 = vpack.c.b16 %v334, %v332
    %v449 = vpack.c.b16 %v335, %v333
    %v450 = vpack.c.b16 %v338, %v336
    %v451 = vpack.c.b16 %v339, %v337
    %v452 = vpack.c.b16 %v342, %v340
    %v453 = vpack.c.b16 %v343, %v341
    %v454 = vpack.c.b16 %v346, %v344
    %v455 = vpack.c.b16 %v347, %v345
    %v456 = vpack.c.b16 %v350, %v348
    %v457 = vpack.c.b16 %v351, %v349
    %v458 = vpack.c.b16 %v354, %v352
    %v459 = vpack.c.b16 %v355, %v353
    %v460 = vpack.c.b16 %v358, %v356
    %v461 = vpack.c.b16 %v359, %v357
    %v462 = vpack.c.b16 %v362, %v360
    %v463 = vpack.c.b16 %v363, %v361
    %v464 = vpack.c.b16 %v366, %v364
    %v465 = vpack.c.b16 %v367, %v365
    %v466 = vpack.c.b16 %v370, %v368
    %v467 = vpack.c.b16 %v371, %v369
    %v468 = vpack.c.b16 %v374, %v372
    %v469 = vpack.c.b16 %v375, %v373
    %v470 = vpack.c.b16 %v378, %v376
    %v471 = vpack.c.b16 %v379, %v377
    %v472 = vpack.c.b16 %v382, %v380
    %v473 = vpack.c.b16 %v383, %v381
    %v474 = vpack.c.b16 %v386, %v384
    %v475 = vpack.c.b16 %v387, %v385
    %v476 = vpack.c.b16 %v390, %v388
    %v477 = vpack.c.b16 %v391, %v389
    %v478 = vpack.c.b16 %v394, %v392
    %v479 = vpack.c.b16 %v395, %v393
    %v480 = vpack.c.b16 %v398, %v396
    %v481 = vpack.c.b16 %v399, %v397
    %v482 = vpack.c.b16 %v402, %v400
    %v483 = vpack.c.b16 %v403, %v401
    %v484 = vpack.c.b16 %v406, %v404
    %v485 = vpack.c.b16 %v407, %v405
    %v486 = vpack.c.b16 %v410, %v408
    %v487 = vpack.c.b16 %v411, %v409
    %v488 = vpack.c.b16 %v412, %v412
    %v489 = vpack.c.b16 %v413, %v413
    %vm564 = vcmask 719872
    %v566 = vsel %vm564, %v184, 0
    %vm568 = vcmask 1043456
    %v570 = vsel %vm568, %v488, 0
    %v573 = vsel %vm568, %v489, 0
    %575 = vmatprep.subr.bf16.mxu0 %v415
    %576 = vmatpush1.bf16.msra.mxu0 %v414
    %577 = vmatprep.subr.bf16.mxu0 %v417
    %578 = vmatpush1.bf16.msra.mxu0 %v416
    %579 = vmatprep.subr.bf16.mxu0 %v419
    %580 = vmatpush1.bf16.msra.mxu0 %v418
    %581 = vmatprep.subr.bf16.mxu0 %v421
    %582 = vmatpush1.bf16.msra.mxu0 %v420
    %583 = vmatprep.subr.bf16.mxu0 %v423
    %584 = vmatpush1.bf16.msra.mxu0 %v422
    %585 = vmatprep.subr.bf16.mxu0 %v425
    %586 = vmatpush1.bf16.msra.mxu0 %v424
    %587 = vmatprep.subr.bf16.mxu0 %v427
    %588 = vmatpush1.bf16.msra.mxu0 %v426
    %589 = vmatprep.subr.bf16.mxu0 %v429
    %590 = vmatpush1.bf16.msra.mxu0 %v428
    %591 = vmatprep.subr.bf16.mxu0 %v431
    %592 = vmatpush1.bf16.msra.mxu0 %v430
    %593 = vmatprep.subr.bf16.mxu0 %v433
    %594 = vmatpush1.bf16.msra.mxu0 %v432
    %595 = vmatprep.subr.bf16.mxu0 %v435
    %596 = vmatpush1.bf16.msra.mxu0 %v434
    %597 = vmatprep.subr.bf16.mxu0 %v437
    %598 = vmatpush1.bf16.msra.mxu0 %v436
    %599 = vmatprep.subr.bf16.mxu0 %v439
    %600 = vmatpush1.bf16.msra.mxu0 %v438
    %601 = vmatprep.subr.bf16.mxu0 %v441
    %602 = vmatpush1.bf16.msra.mxu0 %v440
    %603 = vmatprep.subr.bf16.mxu0 %v443
    %604 = vmatpush1.bf16.msra.mxu0 %v442
    %605 = vmatprep.subr.bf16.mxu0 %v445
    %606 = vmatpush1.bf16.msra.mxu0 %v444
    %607 = vmatprep.mubr.bf16.mxu0 %v181
    %608 = vmatmul.mubr.bf16.gmra.mrb[0].mxu0 %v180
    %v609 = vpop.f32.mrb[0].mxu0
    %v610 = vadd.f32 %v157, %v609
    %v611 = vpop.f32.mrb[0].mxu0
    %v612 = vadd.f32 %v161, %v611
    %v613 = vpop.f32.mrb[0].mxu0
    %v614 = vadd.f32 %v157, %v613
    %v615 = vpop.f32.mrb[0].mxu0
    %v616 = vadd.f32 %v161, %v615
    %617 = vdwg.mxu0
    %618 = vmatprep.subr.bf16.mxu0 %v447
    %619 = vmatpush1.bf16.msra.mxu0 %v446
    %620 = vmatprep.subr.bf16.mxu0 %v449
    %621 = vmatpush1.bf16.msra.mxu0 %v448
    %622 = vmatprep.subr.bf16.mxu0 %v451
    %623 = vmatpush1.bf16.msra.mxu0 %v450
    %624 = vmatprep.subr.bf16.mxu0 %v453
    %625 = vmatpush1.bf16.msra.mxu0 %v452
    %626 = vmatprep.subr.bf16.mxu0 %v455
    %627 = vmatpush1.bf16.msra.mxu0 %v454
    %628 = vmatprep.subr.bf16.mxu0 %v457
    %629 = vmatpush1.bf16.msra.mxu0 %v456
    %630 = vmatprep.subr.bf16.mxu0 %v459
    %631 = vmatpush1.bf16.msra.mxu0 %v458
    %632 = vmatprep.subr.bf16.mxu0 %v461
    %633 = vmatpush1.bf16.msra.mxu0 %v460
    %634 = vmatprep.subr.bf16.mxu0 %v463
    %635 = vmatpush1.bf16.msra.mxu0 %v462
    %636 = vmatprep.subr.bf16.mxu0 %v465
    %637 = vmatpush1.bf16.msra.mxu0 %v464
    %638 = vmatprep.subr.bf16.mxu0 %v467
    %639 = vmatpush1.bf16.msra.mxu0 %v466
    %640 = vmatprep.subr.bf16.mxu0 %v469
    %641 = vmatpush1.bf16.msra.mxu0 %v468
    %642 = vmatprep.subr.bf16.mxu0 %v471
    %643 = vmatpush1.bf16.msra.mxu0 %v470
    %644 = vmatprep.subr.bf16.mxu0 %v473
    %645 = vmatpush1.bf16.msra.mxu0 %v472
    %646 = vmatprep.subr.bf16.mxu0 %v475
    %647 = vmatpush1.bf16.msra.mxu0 %v474
    %648 = vmatprep.subr.bf16.mxu0 %v477
    %649 = vmatpush1.bf16.msra.mxu0 %v476
    %650 = vmatprep.mubr.bf16.mxu0 %v183
    %651 = vmatmul.mubr.bf16.gmra.mrb[0].mxu0 %v182
    %v652 = vpop.f32.mrb[0].mxu0
    %v653 = vadd.f32 %v610, %v652
    %v654 = vpop.f32.mrb[0].mxu0
    %v655 = vadd.f32 %v612, %v654
    %v656 = vpop.f32.mrb[0].mxu0
    %v657 = vadd.f32 %v614, %v656
    %v658 = vpop.f32.mrb[0].mxu0
    %v659 = vadd.f32 %v616, %v658
    %660 = vdwg.mxu0
    %661 = vmatprep.subr.bf16.mxu0 %v479
    %662 = vmatpush1.bf16.msra.mxu0 %v478
    %663 = vmatprep.subr.bf16.mxu0 %v481
    %664 = vmatpush1.bf16.msra.mxu0 %v480
    %665 = vmatprep.subr.bf16.mxu0 %v483
    %666 = vmatpush1.bf16.msra.mxu0 %v482
    %667 = vmatprep.subr.bf16.mxu0 %v485
    %668 = vmatpush1.bf16.msra.mxu0 %v484
    %669 = vmatprep.subr.bf16.mxu0 %v487
    %670 = vmatpush1.bf16.msra.mxu0 %v486
    %671 = vmatprep.subr.bf16.mxu0 %v573
    %672 = vmatpush1.bf16.msra.mxu0 %v570
    %673 = vmatprep.subr.bf16.mxu0 0
    %674 = vmatpush1.bf16.msra.mxu0 0
    %675 = vmatprep.subr.bf16.mxu0 0
    %676 = vmatpush1.bf16.msra.mxu0 0
    %677 = vmatprep.subr.bf16.mxu0 0
    %678 = vmatpush1.bf16.msra.mxu0 0
    %679 = vmatprep.subr.bf16.mxu0 0
    %680 = vmatpush1.bf16.msra.mxu0 0
    %681 = vmatprep.subr.bf16.mxu0 0
    %682 = vmatpush1.bf16.msra.mxu0 0
    %683 = vmatprep.subr.bf16.mxu0 0
    %684 = vmatpush1.bf16.msra.mxu0 0
    %685 = vmatprep.subr.bf16.mxu0 0
    %686 = vmatpush1.bf16.msra.mxu0 0
    %687 = vmatprep.subr.bf16.mxu0 0
    %688 = vmatpush1.bf16.msra.mxu0 0
    %689 = vmatprep.subr.bf16.mxu0 0
    %690 = vmatpush1.bf16.msra.mxu0 0
    %691 = vmatprep.subr.bf16.mxu0 0
    %692 = vmatpush1.bf16.msra.mxu0 0
    %693 = vmatprep.mubr.bf16.mxu0 0
    %694 = vmatmul.mubr.bf16.gmra.mrb[0].mxu0 %v566
    %v695 = vpop.f32.mrb[0].mxu0
    %v696 = vadd.f32 %v653, %v695
    %v697 = vpop.f32.mrb[0].mxu0
    %v698 = vadd.f32 %v655, %v697
    %v699 = vpop.f32.mrb[0].mxu0
    %v700 = vadd.f32 %v657, %v699
    %v701 = vpop.f32.mrb[0].mxu0
    %v702 = vadd.f32 %v659, %v701
    %703 = vdwg.mxu0
    %v704 = vmax.f32 %v696, 0.0
    %v705 = vmax.f32 %v698, 0.0
    %v706 = vmax.f32 %v700, 0.0
    %v707 = vmax.f32 %v702, 0.0
    %v708 = vpack.c.bf16 %v706, %v704
    %v709 = vpack.c.bf16 %v707, %v705
    %v710 = vld [vmem:[#allocation8] sm:$0xf]
    %v711 = vld [vmem:[#allocation8 + $0x4] sm:$0xf]
    %v712 = vld [vmem:[#allocation8 + $0x8] sm:$0xf]
    %v713 = vld [vmem:[#allocation8 + $0xc] sm:$0xf]
    %v714 = vld [vmem:[#allocation8 + $0x10] sm:$0xf]
    %v715 = vld [vmem:[#allocation8 + $0x14] sm:$0xf]
    %v716 = vld [vmem:[#allocation8 + $0x18] sm:$0xf]
    %v717 = vld [vmem:[#allocation8 + $0x1c] sm:$0xf]
    %v718 = vld [vmem:[#allocation8 + $0x20] sm:$0xf]
    %v719 = vld [vmem:[#allocation8 + $0x24] sm:$0xf]
    %v720 = vld [vmem:[#allocation8 + $0x28] sm:$0xf]
    %v721 = vld [vmem:[#allocation8 + $0x2c] sm:$0xf]
    %v722 = vld [vmem:[#allocation8 + $0x30] sm:$0xf]
    %v723 = vld [vmem:[#allocation8 + $0x34] sm:$0xf]
    %v724 = vld [vmem:[#allocation8 + $0x38] sm:$0xf]
    %v725 = vld [vmem:[#allocation8 + $0x3c] sm:$0xf]
    %v726 = vld [vmem:[#allocation8 + $0x40] sm:$0xf]
    %v727 = vld [vmem:[#allocation8 + $0x44] sm:$0xf]
    %v728 = vld [vmem:[#allocation8 + $0x48] sm:$0xf]
    %v729 = vld [vmem:[#allocation8 + $0x4c] sm:$0xf]
    %v730 = vld [vmem:[#allocation8 + $0x50] sm:$0xf]
    %v731 = vld [vmem:[#allocation8 + $0x54] sm:$0xf]
    %v732 = vld [vmem:[#allocation8 + $0x58] sm:$0xf]
    %v733 = vld [vmem:[#allocation8 + $0x5c] sm:$0xf]
    %v734 = vld [vmem:[#allocation8 + $0x60] sm:$0xf]
    %v735 = vld [vmem:[#allocation8 + $0x64] sm:$0xf]
    %v736 = vld [vmem:[#allocation8 + $0x68] sm:$0xf]
    %v737 = vld [vmem:[#allocation8 + $0x6c] sm:$0xf]
    %v738 = vld [vmem:[#allocation8 + $0x70] sm:$0xf]
    %v739 = vld [vmem:[#allocation8 + $0x74] sm:$0xf]
    %v740 = vld [vmem:[#allocation8 + $0x78] sm:$0xf]
    %v741 = vld [vmem:[#allocation8 + $0x7c] sm:$0xf]
    %v742 = vld [vmem:[%s4] sm:$0x1]
    %v744 = vlaneseq
    %v745 = vshrl.u32 %v744, 7
    %v746 = vsub.s32 0, %v745
    %v747 = vrot.slane %v742, %v746
    %v781 = vunpack.c.l.b16 %v710
    %v782 = vunpack.c.l.b16 %v711
    %v783 = vunpack.c.l.b16 %v712
    %v784 = vunpack.c.l.b16 %v713
    %v785 = vunpack.c.l.b16 %v714
    %v786 = vunpack.c.l.b16 %v715
    %v787 = vunpack.c.l.b16 %v716
    %v788 = vunpack.c.l.b16 %v717
    %v789 = vunpack.c.l.b16 %v718
    %v790 = vunpack.c.l.b16 %v719
    %v791 = vunpack.c.l.b16 %v720
    %v792 = vunpack.c.l.b16 %v721
    %v793 = vunpack.c.l.b16 %v722
    %v794 = vunpack.c.l.b16 %v723
    %v795 = vunpack.c.l.b16 %v724
    %v796 = vunpack.c.l.b16 %v725
    %v797 = vunpack.c.l.b16 %v726
    %v798 = vunpack.c.l.b16 %v727
    %v799 = vunpack.c.l.b16 %v728
    %v800 = vunpack.c.l.b16 %v729
    %v801 = vunpack.c.l.b16 %v730
    %v802 = vunpack.c.l.b16 %v731
    %v803 = vunpack.c.l.b16 %v732
    %v804 = vunpack.c.l.b16 %v733
    %v805 = vunpack.c.l.b16 %v734
    %v806 = vunpack.c.l.b16 %v735
    %v807 = vunpack.c.l.b16 %v736
    %v808 = vunpack.c.l.b16 %v737
    %v809 = vunpack.c.l.b16 %v738
    %v810 = vunpack.c.l.b16 %v739
    %v811 = vunpack.c.l.b16 %v740
    %v812 = vunpack.c.l.b16 %v741
    %v813 = vpack.c.b16 %v782, %v781
    %v814 = vpack.c.b16 %v784, %v783
    %v815 = vpack.c.b16 %v786, %v785
    %v816 = vpack.c.b16 %v788, %v787
    %v817 = vpack.c.b16 %v790, %v789
    %v818 = vpack.c.b16 %v792, %v791
    %v819 = vpack.c.b16 %v794, %v793
    %v820 = vpack.c.b16 %v796, %v795
    %v821 = vpack.c.b16 %v798, %v797
    %v822 = vpack.c.b16 %v800, %v799
    %v823 = vpack.c.b16 %v802, %v801
    %v824 = vpack.c.b16 %v804, %v803
    %v825 = vpack.c.b16 %v806, %v805
    %v826 = vpack.c.b16 %v808, %v807
    %v827 = vpack.c.b16 %v810, %v809
    %v828 = vpack.c.b16 %v812, %v811
    %845 = vmatprep.subr.bf16.mxu0 0
    %846 = vmatpush1.bf16.msra.mxu0 %v813
    %847 = vmatprep.subr.bf16.mxu0 0
    %848 = vmatpush1.bf16.msra.mxu0 %v814
    %849 = vmatprep.subr.bf16.mxu0 0
    %850 = vmatpush1.bf16.msra.mxu0 %v815
    %851 = vmatprep.subr.bf16.mxu0 0
    %852 = vmatpush1.bf16.msra.mxu0 %v816
    %853 = vmatprep.subr.bf16.mxu0 0
    %854 = vmatpush1.bf16.msra.mxu0 %v817
    %855 = vmatprep.subr.bf16.mxu0 0
    %856 = vmatpush1.bf16.msra.mxu0 %v818
    %857 = vmatprep.subr.bf16.mxu0 0
    %858 = vmatpush1.bf16.msra.mxu0 %v819
    %859 = vmatprep.subr.bf16.mxu0 0
    %860 = vmatpush1.bf16.msra.mxu0 %v820
    %861 = vmatprep.subr.bf16.mxu0 0
    %862 = vmatpush1.bf16.msra.mxu0 %v821
    %863 = vmatprep.subr.bf16.mxu0 0
    %864 = vmatpush1.bf16.msra.mxu0 %v822
    %865 = vmatprep.subr.bf16.mxu0 0
    %866 = vmatpush1.bf16.msra.mxu0 %v823
    %867 = vmatprep.subr.bf16.mxu0 0
    %868 = vmatpush1.bf16.msra.mxu0 %v824
    %869 = vmatprep.subr.bf16.mxu0 0
    %870 = vmatpush1.bf16.msra.mxu0 %v825
    %871 = vmatprep.subr.bf16.mxu0 0
    %872 = vmatpush1.bf16.msra.mxu0 %v826
    %873 = vmatprep.subr.bf16.mxu0 0
    %874 = vmatpush1.bf16.msra.mxu0 %v827
    %875 = vmatprep.subr.bf16.mxu0 0
    %876 = vmatpush1.bf16.msra.mxu0 %v828
    %877 = vmatprep.mubr.bf16.mxu0 %v709
    %878 = vmatmul.mubr.bf16.gmra.mrb[0].mxu0 %v708
    %v879 = vpop.f32.mrb[0].mxu0
    %v880 = vadd.f32 %v747, %v879
    %v881 = vpop.f32.mrb[0].mxu0
    %v882 = vpop.f32.mrb[0].mxu0
    %v883 = vadd.f32 %v747, %v882
    %v884 = vpop.f32.mrb[0].mxu0
    %885 = vdwg.mxu0
    %v886 = vmax.f32 %v880, 0.0
    %v887 = vmax.f32 %v883, 0.0
    %v888 = vld [vmem:[%s5] sm:$0x1]
    %889 = vxpose.xlu0.b32.start [1/16] %v886, 128
    %890 = vxpose.xlu0.b32.cont [2/16] %v887, 128
    %891 = vxpose.xlu0.b32.cont [3/16] 0.0, 128
    %892 = vxpose.xlu0.b32.cont [4/16] 0.0, 128
    %893 = vxpose.xlu0.b32.cont [5/16] 0.0, 128
    %894 = vxpose.xlu0.b32.cont [6/16] 0.0, 128
    %895 = vxpose.xlu0.b32.cont [7/16] 0.0, 128
    %896 = vxpose.xlu0.b32.cont [8/16] 0.0, 128
    %897 = vxpose.xlu0.b32.cont [9/16] 0.0, 128
    %898 = vxpose.xlu0.b32.cont [10/16] 0.0, 128
    %899 = vxpose.xlu0.b32.cont [11/16] 0.0, 128
    %900 = vxpose.xlu0.b32.cont [12/16] 0.0, 128
    %901 = vxpose.xlu0.b32.cont [13/16] 0.0, 128
    %902 = vxpose.xlu0.b32.cont [14/16] 0.0, 128
    %903 = vxpose.xlu0.b32.cont [15/16] 0.0, 128
    %904 = vxpose.xlu0.b32.end [16/16] 0.0, 128
    %v905 = vpop.trf.xlu0
    %v906 = vpop.trf.xlu0
    %v907 = vpop.trf.xlu0
    %v908 = vpop.trf.xlu0
    %v909 = vpop.trf.xlu0
    %v910 = vpop.trf.xlu0
    %v911 = vpop.trf.xlu0
    %v912 = vpop.trf.xlu0
    %v913 = vpop.trf.xlu0
    %v914 = vpop.trf.xlu0
    %v915 = vpop.trf.xlu0
    %v916 = vpop.trf.xlu0
    %v917 = vpop.trf.xlu0
    %v918 = vpop.trf.xlu0
    %v919 = vpop.trf.xlu0
    %v920 = vpop.trf.xlu0
    %v921 = vpack.c.bf16 %v906, %v905
    %v922 = vpack.c.bf16 %v908, %v907
    %v923 = vpack.c.bf16 %v910, %v909
    %v924 = vpack.c.bf16 %v912, %v911
    %v925 = vpack.c.bf16 %v914, %v913
    %v926 = vpack.c.bf16 %v916, %v915
    %v927 = vpack.c.bf16 %v918, %v917
    %v928 = vpack.c.bf16 %v920, %v919
    %v929 = vld [vmem:[#allocation2] sm:$0x1]
    %931 = vset.pattern.permute.xlu0 0
    %932 = vperm.xlu0 %931, %v929
    %v933 = vpop.permute.xlu0 %932
    %v935 = vlaneseq
    %v936 = vshrl.u32 %v935, 7
    %v937 = vsub.s32 0, %v936
    %v938 = vrot.slane %v933, %v937
    %939 = vmatprep.subr.bf16.mxu0 0
    %940 = vmatpush1.bf16.msra.mxu0 %v921
    %941 = vmatprep.subr.bf16.mxu0 0
    %942 = vmatpush1.bf16.msra.mxu0 %v922
    %943 = vmatprep.subr.bf16.mxu0 0
    %944 = vmatpush1.bf16.msra.mxu0 %v923
    %945 = vmatprep.subr.bf16.mxu0 0
    %946 = vmatpush1.bf16.msra.mxu0 %v924
    %947 = vmatprep.subr.bf16.mxu0 0
    %948 = vmatpush1.bf16.msra.mxu0 %v925
    %949 = vmatprep.subr.bf16.mxu0 0
    %950 = vmatpush1.bf16.msra.mxu0 %v926
    %951 = vmatprep.subr.bf16.mxu0 0
    %952 = vmatpush1.bf16.msra.mxu0 %v927
    %953 = vmatprep.subr.bf16.mxu0 0
    %954 = vmatpush1.bf16.msra.mxu0 %v928
    %955 = vmatprep.subr.bf16.mxu0 0
    %956 = vmatpush1.bf16.msra.mxu0 0
    %957 = vmatprep.subr.bf16.mxu0 0
    %958 = vmatpush1.bf16.msra.mxu0 0
    %959 = vmatprep.subr.bf16.mxu0 0
    %960 = vmatpush1.bf16.msra.mxu0 0
    %961 = vmatprep.subr.bf16.mxu0 0
    %962 = vmatpush1.bf16.msra.mxu0 0
    %963 = vmatprep.subr.bf16.mxu0 0
    %964 = vmatpush1.bf16.msra.mxu0 0
    %965 = vmatprep.subr.bf16.mxu0 0
    %966 = vmatpush1.bf16.msra.mxu0 0
    %967 = vmatprep.subr.bf16.mxu0 0
    %968 = vmatpush1.bf16.msra.mxu0 0
    %969 = vmatprep.subr.bf16.mxu0 0
    %970 = vmatpush1.bf16.msra.mxu0 0
    %971 = vmatprep.mubr.bf16.mxu0 0
    %972 = vmatmul.mubr.bf16.gmra.mrb[0].mxu0 %v888
    %v973 = vpop.f32.mrb[0].mxu0
    %v974 = vadd.f32 %v938, %v973
    %v975 = vpop.f32.mrb[0].mxu0
    %v976 = vpop.f32.mrb[0].mxu0
    %v977 = vpop.f32.mrb[0].mxu0
    %978 = vdwg.mxu0
    %vm979 = vcmask 122880
    %980 = vst.msk [vmem:[#allocation9] sm:$0x1] %vm979, %v974
    // Predicated region
    $region42: #{tpu_custom_call.1} parent=1 // pred_check
      _
    $region43: #{tpu_custom_call.1} parent=1 // pred_check_branch
      %982 = sbr.rel (0) target = $region45
    $region44: #{tpu_custom_call.1} parent=1 // pred_region
      %s984 = ssub.s32 16, 16
      %985 = vsyncadd [#allocation5], %s984
      %s987 = sshll.u32 [#allocation9], 4
      %s988 = int_to_ptr.vmem [resolvable:$true] %s987
      %990 = dma.vmem_to_hbm [thread:$0]  %s988, 16, %s7, [#allocation5]
    $region45: #{tpu_custom_call.1} parent=1 // pred_fallthru
      _
    // Predicated region
    $region46: #{tpu_custom_call.1} parent=1 // pred_check
      _
    $region47: #{tpu_custom_call.1} parent=1 // pred_check_branch
      %992 = sbr.rel (0) target = $region49
    $region48: #{tpu_custom_call.1} parent=1 // pred_region
      %993 = dma.done [#allocation5], 16
    $region49: #{tpu_custom_call.1} parent=1 // pred_fallthru
      _
    %994 = vsyncpa [#allocation4], 1
    %995 = vsyncpa [#allocation7], 1
    %996 = vsyncpa [#allocation5], 1

</llo_original>
